<compile_context>
chip_gen: v7x
topology: tpu7x:2x2x1
jax: 0.10.0
libtpu: 0.0.40
codegen_flags: <defaults>
</compile_context>

<pallas_src>
import functools

import jax
import jax.numpy as jnp
from jax.experimental import pallas as pl
from jax.experimental.pallas import tpu as pltpu


def _round_up(n, m):
    return ((n + m - 1) // m) * m


def _affine_kernel(wb_ref, x_ref, o_ref):
    # wb_ref: SMEM (3,) f32 = [w_eff[0], w_eff[1], b_eff]  (all 3 layers folded)
    # x_ref : VMEM (2, TB)  -- batch on the lane axis
    # o_ref : VMEM (1, TB)  -- lane-dense, unmasked stores
    w0 = wb_ref[0]
    w1 = wb_ref[1]
    b = wb_ref[2]
    x = x_ref[...]
    # Pure-VPU broadcast FMAs; no MXU round-trip for a K=2 / N=1 contraction.
    o_ref[...] = (x[0:1, :] * w0 + x[1:2, :] * w1 + b).astype(o_ref.dtype)


@functools.partial(jax.jit, static_argnames=("tile_b",))
def my_neural_network_forward(x, params, *, tile_b=1024):
    """Forward pass of MyNeuralNetwork.

    x: [B, 2] float32.
    params: dict of (w1,b1,w2,b2,w3,b3) with weights stored [in_features, out_features]
            (transposed vs. PyTorch), so each layer is y = x @ W + b.
    """
    B = x.shape[0]

    # ---- Fold the three (activation-free) linear layers into one affine map. Exact.
    w_eff = params["w1"] @ params["w2"] @ params["w3"]                                   # (2, 1)
    b_eff = (params["b1"] @ params["w2"] + params["b2"]) @ params["w3"] + params["b3"]   # (1, 1)
    wb = jnp.concatenate([w_eff.reshape(-1), b_eff.reshape(-1)]).astype(jnp.float32)     # (3,)

    # ---- Lane-dense layout: batch on the lane (last) axis, padded to the lane tile.
    tb = min(tile_b, _round_up(B, 128))          # lane tile, always a multiple of 128
    b_pad = _round_up(B, tb)
    x_t = jnp.pad(x.T.astype(jnp.float32), ((0, 0), (0, b_pad - B)))  # (2, B_pad)

    grid = (b_pad // tb,)

    y_t = pl.pallas_call(
        _affine_kernel,
        out_shape=jax.ShapeDtypeStruct((1, b_pad), jnp.float32),
        grid=grid,
        in_specs=[
            # Folded weights + bias: 3 scalars in SMEM, broadcast on the VPU.
            pl.BlockSpec(memory_space=pltpu.MemorySpace.SMEM),
            # Batch-tiled input: (2, tb) block per grid step -> double-buffered DMA.
            pl.BlockSpec((2, tb), lambda i: (0, i)),
        ],
        out_specs=pl.BlockSpec((1, tb), lambda i: (0, i)),
        compiler_params=pltpu.CompilerParams(
            # Independent batch tiles: lets v7x shard the grid across its 2 TensorCores.
            dimension_semantics=("parallel",),
            # Explicit VMEM budget with headroom for v7x (64 MiB physical VMEM).
            vmem_limit_bytes=32 * 1024 * 1024,
        ),
    )(wb, x_t)

    return y_t[:, :B].T  # back to [B, 1]


def init_params(key):
    """Deterministic init matching PyTorch nn.Linear default: U(-1/sqrt(fan_in), +1/sqrt(fan_in)).
    Weights are stored as [in_features, out_features] (transposed vs. torch)."""
    def linear(key, fan_in, fan_out):
        kw, kb = jax.random.split(key)
        bound = 1.0 / jnp.sqrt(fan_in)
        w = jax.random.uniform(kw, (fan_in, fan_out), jnp.float32, -bound, bound)
        b = jax.random.uniform(kb, (1, fan_out), jnp.float32, -bound, bound)
        return w, b

    k1, k2, k3 = jax.random.split(key, 3)
    w1, b1 = linear(k1, 2, 2)   # hidden1: Linear(2, 2)
    w2, b2 = linear(k2, 2, 2)   # hidden2: Linear(2, 2)
    w3, b3 = linear(k3, 2, 1)   # output:  Linear(2, 1)
    return {"w1": w1, "b1": b1, "w2": w2, "b2": b2, "w3": w3, "b3": b3}


if __name__ == "__main__":
    key = jax.random.PRNGKey(0)
    kp, kx = jax.random.split(key)

    params = init_params(kp)
    x = jax.random.normal(kx, (8, 2), dtype=jnp.float32)  # batch=8, in_features=2

    out = my_neural_network_forward(x, params)
    out = jax.block_until_ready(out)

    # Pure-JAX reference of the original (unfolded) 3-layer forward pass.
    ref = x @ params["w1"] + params["b1"]
    ref = ref @ params["w2"] + params["b2"]
    ref = ref @ params["w3"] + params["b3"]
    assert out.shape == (8, 1)
    assert jnp.allclose(out, ref, atol=1e-5, rtol=1e-5)

    print("KERNEL_OK")
</pallas_src>

<mosaic_0001>
module attributes {stable_mosaic.version = 11 : i64} {
  func.func @_affine_kernel(%arg0: i32, %arg1: memref<3xf32, #tpu.memory_space<smem>>, %arg2: memref<2x128xf32, #tpu.memory_space<vmem>>, %arg3: memref<1x128xf32, #tpu.memory_space<vmem>>) attributes {dimension_semantics = [#tpu.dimension_semantics<parallel>], iteration_bounds = array<i64: 1>, scalar_prefetch = 0 : i64, scratch_operands = 0 : i64, tpu.core_type = #tpu.core_type<tc>, window_params = [{transform_indices = @transform_0, window_bounds = array<i64: 3>}, {transform_indices = @transform_1, window_bounds = array<i64: 2, 128>}, {transform_indices = @transform_2, window_bounds = array<i64: 1, 128>}]} {
    %c0 = arith.constant 0 : index
    %0 = memref.load %arg1[%c0] : memref<3xf32, #tpu.memory_space<smem>>
    %c1 = arith.constant 1 : index
    %1 = memref.load %arg1[%c1] : memref<3xf32, #tpu.memory_space<smem>>
    %c2 = arith.constant 2 : index
    %2 = memref.load %arg1[%c2] : memref<3xf32, #tpu.memory_space<smem>>
    %c0_0 = arith.constant 0 : index
    %c0_1 = arith.constant 0 : index
    %3 = vector.load %arg2[%c0_0, %c0_1] : memref<2x128xf32, #tpu.memory_space<vmem>>, vector<2x128xf32>
    %4 = vector.extract_strided_slice %3 {offsets = [0, 0], sizes = [1, 128], strides = [1, 1]} : vector<2x128xf32> to vector<1x128xf32>
    %5 = vector.broadcast %0 : f32 to vector<1x128xf32>
    %6 = arith.mulf %4, %5 : vector<1x128xf32>
    %7 = vector.extract_strided_slice %3 {offsets = [1, 0], sizes = [1, 128], strides = [1, 1]} : vector<2x128xf32> to vector<1x128xf32>
    %8 = vector.broadcast %1 : f32 to vector<1x128xf32>
    %9 = arith.mulf %7, %8 : vector<1x128xf32>
    %10 = arith.addf %6, %9 : vector<1x128xf32>
    %11 = vector.broadcast %2 : f32 to vector<1x128xf32>
    %12 = arith.addf %10, %11 : vector<1x128xf32>
    %c0_2 = arith.constant 0 : index
    %c0_3 = arith.constant 0 : index
    %13 = vector.load %arg3[%c0_2, %c0_3] : memref<1x128xf32, #tpu.memory_space<vmem>>, vector<1x128xf32>
    tpu.vector_store %arg3[%c0_2, %c0_3], %12 {strides = array<i32>} : memref<1x128xf32, #tpu.memory_space<vmem>>, vector<1x128xf32>,
    return
  }
  func.func @transform_0(%arg0: i32) -> i32 {
    %c0_i32 = arith.constant 0 : i32
    %c0_i32_0 = arith.constant 0 : i32
    return %c0_i32 : i32
  }
  func.func @transform_1(%arg0: i32) -> (i32, i32) {
    %c0_i32 = arith.constant 0 : i32
    %c0_i32_0 = arith.constant 0 : i32
    return %c0_i32, %arg0 : i32, i32
  }
  func.func @transform_2(%arg0: i32) -> (i32, i32) {
    %c0_i32 = arith.constant 0 : i32
    %c0_i32_0 = arith.constant 0 : i32
    return %c0_i32, %arg0 : i32, i32
  }
}

</mosaic_0001>

<llo_original>
// kernel: my_neural_network_forward.1
$region0: #{my_neural_network_forward.1}
  #allocation0 [shape = 'u32[]', space=smem, size = 0x4, offset = 0x4, fixed_abs, tag = 'smem constant byte address 0x4 - core index']
  #allocation1 [shape = 'u32[144,128]{1,0:T(1,128)}', space=vmem, size = 0x12000, scoped, tag = 'internal scratch']
  %s0 = inlined_call_operand.vmem [shape: f32[3], index: 0, kind: input, shape index: {}]
  %s1 = inlined_call_operand.vmem [shape: f32[2,128], index: 1, kind: input, shape index: {}]
  %s2 = inlined_call_operand.vmem [shape: f32[1,128], index: 2, kind: output, shape index: {}]
  %s3 = sld [smem:[#allocation0]]
  $region22: #{my_neural_network_forward.1} parent=0
    _
  %s5 = ssub.s32 1, %s3
  %s6 = scalar_select 0, %s5, %s3
  $region1: #{my_neural_network_forward.1} parent=0
    #allocation2 [shape = 'u8[512]{0}', space=smem, size = 0x200, scoped, tag = 'input window, operand 0, single buffered']
    #allocation3 [shape = 's32[1]{0}', space=sflag, size = 0x4, scoped, tag = 'scoped memory for my_neural_network_forward.1']
    %7 = vsyncpa [#allocation3], 0
    // Predicated region
    $region2: #{my_neural_network_forward.1} parent=1 // pred_check
      _
    $region3: #{my_neural_network_forward.1} parent=1 // pred_check_branch
      %9 = sbr.rel (0) target = $region5
    $region4: #{my_neural_network_forward.1} parent=1 // pred_region
      %s11 = ssub.s32 16, 16
      %12 = vsyncadd [#allocation3], %s11
      %s14 = sshll.u32 %s0, 4
      %s15 = int_to_ptr.vmem [resolvable:$true] %s14
      %17 = dma.vmem_to_smem %s15, 16, [#allocation2], [#allocation3]
    $region5: #{my_neural_network_forward.1} parent=1 // pred_fallthru
      _
    // Predicated region
    $region6: #{my_neural_network_forward.1} parent=1 // pred_check
      _
    $region7: #{my_neural_network_forward.1} parent=1 // pred_check_branch
      %19 = sbr.rel (0) target = $region9
    $region8: #{my_neural_network_forward.1} parent=1 // pred_region
      _
    $region9: #{my_neural_network_forward.1} parent=1 // pred_fallthru
      _
    // Predicated region
    $region10: #{my_neural_network_forward.1} parent=1 // pred_check
      _
    $region11: #{my_neural_network_forward.1} parent=1 // pred_check_branch
      %21 = sbr.rel (0) target = $region13
    $region12: #{my_neural_network_forward.1} parent=1 // pred_region
      %22 = dma.done [#allocation3], 16
    $region13: #{my_neural_network_forward.1} parent=1 // pred_fallthru
      _
    %23 = sfence
    %s24 = sld [smem:[#allocation2]]
    %s25 = sld [smem:[#allocation2 + $0x1]]
    %s26 = sld [smem:[#allocation2 + $0x2]]
    %v27 = vld [vmem:[%s1] sm:$0x3]
    %v28 = vstv %s24
    %v29 = vmul.f32 %v27, %v28
    %v30 = vstv %s25
    %v31 = vmul.f32 %v27, %v30
    %v33 = vrot.slane %v31, 1
    %v35 = vadd.f32 %v29, %v33
    %v36 = vstv %s26
    %v37 = vadd.f32 %v35, %v36
    %38 = vst [vmem:[%s2] sm:$0x1] %v37
    // Predicated region
    $region14: #{my_neural_network_forward.1} parent=1 // pred_check
      _
    $region15: #{my_neural_network_forward.1} parent=1 // pred_check_branch
      %40 = sbr.rel (0) target = $region17
    $region16: #{my_neural_network_forward.1} parent=1 // pred_region
      _
    $region17: #{my_neural_network_forward.1} parent=1 // pred_fallthru
      _
    // Predicated region
    $region18: #{my_neural_network_forward.1} parent=1 // pred_check
      _
    $region19: #{my_neural_network_forward.1} parent=1 // pred_check_branch
      %42 = sbr.rel (0) target = $region21
    $region20: #{my_neural_network_forward.1} parent=1 // pred_region
      _
    $region21: #{my_neural_network_forward.1} parent=1 // pred_fallthru
      _
    %43 = vsyncpa [#allocation3], 1

</llo_original>
